<compile_context>
chip_gen: v6e
topology: v6e:2x2x1
jax: 0.10.0
libtpu: 0.0.40
codegen_flags: <defaults>
</compile_context>

<pallas_src>
import functools

import jax
import jax.numpy as jnp
from jax.experimental import pallas as pl
from jax.experimental.pallas import tpu as pltpu

LANE = 128            # lane-dense padded width for features / hidden / classes
HIDDEN = 16           # GCN hidden size (fixed by the module)
JK_HID = 32           # JumpingKnowledge LSTM hidden: (num_layers * channels) // 2
GATES = 4 * JK_HID    # stacked gate width (i,f,g,o) = 128 lanes
NEG_INF = -1e30


# ---------------------------------------------------------------------------
# small helpers
# ---------------------------------------------------------------------------
def _round_up(n, m):
    return ((n + m - 1) // m) * m


def _pad_to(x, shape):
    return jnp.pad(x, [(0, t - s) for s, t in zip(x.shape, shape)])


def _itemsize(dt):
    return jnp.dtype(dt).itemsize


def _vmem_budget(np_, tile_m, tile_k, x_resident):
    a_buf = 3 * tile_m * tile_k * 2
    x_buf = 2 * np_ * LANE * 2 if x_resident else 3 * tile_k * LANE * 2
    work = (a_buf + x_buf + tile_m * LANE * 4          # accumulator
            + 2 * tile_m * LANE * 4                    # output buffers
            + 6 * LANE * LANE * 4)                     # resident weights
    budget = int(1.5 * work) + (8 << 20)
    # stay inside v7x's 64 MiB physical VMEM; v5e/v6e have 128 MiB
    return max(32 << 20, min(budget, 60 << 20))


def _sigmoid(x):
    return 1.0 / (1.0 + jnp.exp(-x))


# ---------------------------------------------------------------------------
# Kernel A: tiled dense aggregation with fused epilogue
#   out = epilogue((A_hat @ X) @ W + b)
# grid = (row tiles "parallel", reduction "arbitrary"); f32 VMEM accumulator.
# ---------------------------------------------------------------------------
def _agg_kernel(a_ref, x_ref, w_ref, b_ref, o_ref, acc_ref, *,
                epilogue, tile_k, x_resident):
    k = pl.program_id(1)

    @pl.when(k == 0)
    def _():
        acc_ref[...] = jnp.zeros_like(acc_ref)

    if x_resident:
        off = pl.multiple_of(k * tile_k, tile_k)
        x_blk = x_ref[pl.ds(off, tile_k), :]
    else:
        x_blk = x_ref[...]
    acc_ref[...] += jnp.dot(a_ref[...], x_blk, preferred_element_type=jnp.float32)

    @pl.when(k == pl.num_programs(1) - 1)
    def _():
        # epilogue weight matmul kept in f32 to preserve the f32 accumulation
        z = jnp.dot(acc_ref[...], w_ref[...],
                    preferred_element_type=jnp.float32) + b_ref[...]
        if epilogue == "relu":
            o_ref[...] = jnp.maximum(z, 0.0).astype(o_ref.dtype)
        elif epilogue == "log_softmax":
            m = jnp.max(z, axis=-1, keepdims=True)
            e = jnp.exp(z - m)
            s = jnp.sum(e, axis=-1, keepdims=True)
            o_ref[...] = (z - m - jnp.log(s)).astype(o_ref.dtype)
        else:  # identity
            o_ref[...] = z.astype(o_ref.dtype)


def _agg_layer(adj, x, w, b, *, epilogue, out_dtype, tile_m, tile_k, x_resident):
    np_ = adj.shape[0]
    grid = (np_ // tile_m, np_ // tile_k)
    a_kwargs = {"pipeline_mode": pl.Buffered(3)} if grid[1] >= 3 else {}
    a_spec = pl.BlockSpec((tile_m, tile_k), lambda i, k: (i, k), **a_kwargs)
    if x_resident:
        x_spec = pl.BlockSpec((np_, LANE), lambda i, k: (0, 0))     # resident
    else:
        x_spec = pl.BlockSpec((tile_k, LANE), lambda i, k: (k, 0))  # streamed

    flops = 2 * np_ * np_ * LANE + 2 * np_ * LANE * LANE
    bytes_accessed = (adj.size * _itemsize(adj.dtype) + x.size * _itemsize(x.dtype)
                      + w.size * _itemsize(w.dtype)
                      + np_ * LANE * _itemsize(out_dtype))
    transcend = np_ * LANE if epilogue == "log_softmax" else 0

    return pl.pallas_call(
        functools.partial(_agg_kernel, epilogue=epilogue, tile_k=tile_k,
                          x_resident=x_resident),
        out_shape=jax.ShapeDtypeStruct((np_, LANE), out_dtype),
        grid_spec=pltpu.PrefetchScalarGridSpec(
            num_scalar_prefetch=0,
            grid=grid,
            in_specs=[
                a_spec,                                             # A_hat tile (bf16)
                x_spec,                                             # X (bf16)
                pl.BlockSpec((LANE, LANE), lambda i, k: (0, 0)),    # W, resident (f32)
                pl.BlockSpec((1, LANE), lambda i, k: (0, 0)),       # bias, resident
            ],
            out_specs=pl.BlockSpec((tile_m, LANE), lambda i, k: (i, 0)),
            scratch_shapes=[pltpu.VMEM((tile_m, LANE), jnp.float32)],
        ),
        compiler_params=pltpu.CompilerParams(
            dimension_semantics=("parallel", "arbitrary"),
            vmem_limit_bytes=_vmem_budget(np_, tile_m, tile_k, x_resident)),
        cost_estimate=pl.CostEstimate(flops=int(flops),
                                      transcendentals=int(transcend),
                                      bytes_accessed=int(bytes_accessed)),
    )(adj, x, w, b)


# ---------------------------------------------------------------------------
# Kernel B: layer-2 aggregation fused with GCNConv epilogue + JumpingKnowledge
# ('lstm') bi-LSTM attention.  Output is xjk directly (h2 never hits HBM).
# ---------------------------------------------------------------------------
def _lstm_step(x_in, h, c, wih, whh, bg):
    # one (TM,128)x(128,128) ih matmul + one (TM,32)x(32,128) hh matmul, then
    # static lane slices to extract the 4 gates (i, f, g, o — PyTorch order).
    g_all = (jnp.dot(x_in, wih, preferred_element_type=jnp.float32)
             + jnp.dot(h, whh, preferred_element_type=jnp.float32) + bg)
    i = _sigmoid(g_all[:, 0 * JK_HID:1 * JK_HID])
    f = _sigmoid(g_all[:, 1 * JK_HID:2 * JK_HID])
    g = jnp.tanh(g_all[:, 2 * JK_HID:3 * JK_HID])
    o = _sigmoid(g_all[:, 3 * JK_HID:4 * JK_HID])
    c_new = f * c + i * g
    h_new = o * jnp.tanh(c_new)
    return h_new, c_new


def _agg_jk_kernel(a_ref, x_ref, h1_ref, w2_ref, b2_ref,
                   wih_f_ref, whh_f_ref, bg_f_ref,
                   wih_b_ref, whh_b_ref, bg_b_ref,
                   aw_f_ref, aw_b_ref, ab_ref,
                   o_ref, acc_ref, *, tile_k, x_resident):
    k = pl.program_id(1)

    @pl.when(k == 0)
    def _():
        acc_ref[...] = jnp.zeros_like(acc_ref)

    if x_resident:
        off = pl.multiple_of(k * tile_k, tile_k)
        x_blk = x_ref[pl.ds(off, tile_k), :]
    else:
        x_blk = x_ref[...]
    acc_ref[...] += jnp.dot(a_ref[...], x_blk, preferred_element_type=jnp.float32)

    @pl.when(k == pl.num_programs(1) - 1)
    def _():
        # GCNConv(16,16) epilogue: h2 = relu(acc @ W2 + b2)  (f32)
        h2 = jnp.maximum(
            jnp.dot(acc_ref[...], w2_ref[...], preferred_element_type=jnp.float32)
            + b2_ref[...], 0.0)
        h1 = h1_ref[...].astype(jnp.float32)
        tm = h1.shape[0]
        zeros = jnp.zeros((tm, JK_HID), jnp.float32)

        # hoisted bias broadcasts (JAX does not CSE broadcast_in_dim)
        bg_f = jnp.broadcast_to(bg_f_ref[...], (tm, GATES))
        bg_b = jnp.broadcast_to(bg_b_ref[...], (tm, GATES))
        wih_f, whh_f = wih_f_ref[...], whh_f_ref[...]
        wih_b, whh_b = wih_b_ref[...], whh_b_ref[...]

        # bidirectional LSTM over the length-2 sequence [h1, h2] (unrolled)
        h_f0, c_f = _lstm_step(h1, zeros, zeros, wih_f, whh_f, bg_f)
        h_f1, _ = _lstm_step(h2, h_f0, c_f, wih_f, whh_f, bg_f)
        h_b1, c_b = _lstm_step(h2, zeros, zeros, wih_b, whh_b, bg_b)   # reversed seq
        h_b0, _ = _lstm_step(h1, h_b1, c_b, wih_b, whh_b, bg_b)

        # attention scores over the 2 timesteps + softmax
        aw_f = aw_f_ref[...]          # (1, JK_HID)
        aw_b = aw_b_ref[...]
        ab = ab_ref[...]              # (1, 1)
        a0 = (jnp.sum(h_f0 * aw_f, axis=-1, keepdims=True)
              + jnp.sum(h_b0 * aw_b, axis=-1, keepdims=True) + ab)
        a1 = (jnp.sum(h_f1 * aw_f, axis=-1, keepdims=True)
              + jnp.sum(h_b1 * aw_b, axis=-1, keepdims=True) + ab)
        m = jnp.maximum(a0, a1)
        e0 = jnp.exp(a0 - m)
        e1 = jnp.exp(a1 - m)
        inv = 1.0 / (e0 + e1)         # exact division: alpha0 + alpha1 == 1
        o_ref[...] = ((e0 * inv) * h1 + (e1 * inv) * h2).astype(o_ref.dtype)


def _agg_jk_layer(adj, h1, p, *, tile_m, tile_k, x_resident, out_dtype):
    np_ = adj.shape[0]
    grid = (np_ // tile_m, np_ // tile_k)
    a_kwargs = {"pipeline_mode": pl.Buffered(3)} if grid[1] >= 3 else {}
    a_spec = pl.BlockSpec((tile_m, tile_k), lambda i, k: (i, k), **a_kwargs)
    if x_resident:
        x_spec = pl.BlockSpec((np_, LANE), lambda i, k: (0, 0))
    else:
        x_spec = pl.BlockSpec((tile_k, LANE), lambda i, k: (k, 0))
    row_spec = pl.BlockSpec((tile_m, LANE), lambda i, k: (i, 0))

    def full(arr):
        return pl.BlockSpec(arr.shape, lambda i, k, nd=arr.ndim: (0,) * nd)

    weights = [p["w2"], p["b2"],
               p["wih_f"], p["whh_f"], p["bg_f"],
               p["wih_b"], p["whh_b"], p["bg_b"],
               p["aw_f"], p["aw_b"], p["ab"]]

    flops = (2 * np_ * np_ * LANE + 2 * np_ * LANE * LANE
             + 8 * np_ * LANE * GATES)
    bytes_accessed = (adj.size * _itemsize(adj.dtype)
                      + 2 * h1.size * _itemsize(h1.dtype)
                      + np_ * LANE * _itemsize(out_dtype))

    return pl.pallas_call(
        functools.partial(_agg_jk_kernel, tile_k=tile_k, x_resident=x_resident),
        out_shape=jax.ShapeDtypeStruct((np_, LANE), out_dtype),
        grid_spec=pltpu.PrefetchScalarGridSpec(
            num_scalar_prefetch=0,
            grid=grid,
            in_specs=[a_spec, x_spec, row_spec] + [full(a) for a in weights],
            out_specs=pl.BlockSpec((tile_m, LANE), lambda i, k: (i, 0)),
            scratch_shapes=[pltpu.VMEM((tile_m, LANE), jnp.float32)],
        ),
        compiler_params=pltpu.CompilerParams(
            dimension_semantics=("parallel", "arbitrary"),
            vmem_limit_bytes=_vmem_budget(np_, tile_m, tile_k, x_resident)),
        cost_estimate=pl.CostEstimate(flops=int(flops),
                                      transcendentals=int(20 * np_ * JK_HID),
                                      bytes_accessed=int(bytes_accessed)),
    )(adj, h1, h1, *weights)


# ---------------------------------------------------------------------------
# Plain-JAX glue: adjacency normalization, padding, parameter packing
# ---------------------------------------------------------------------------
def build_gcn_adj(edge_index, num_nodes):
    """Dense A_hat = D^{-1/2} (A + I) D^{-1/2}  (PyG gcn_norm, add_self_loops)."""
    src, dst = edge_index
    a = jnp.zeros((num_nodes, num_nodes), jnp.float32).at[dst, src].add(1.0)
    a = a + jnp.eye(num_nodes, dtype=jnp.float32)
    deg = a.sum(axis=1)
    dinv = jnp.where(deg > 0, 1.0 / jnp.sqrt(deg), 0.0)
    return dinv[:, None] * a * dinv[None, :]


def prepare_params(raw):
    """Pad / repack raw (PyTorch-layout) parameters for the Pallas kernels."""
    hid = JK_HID
    num_classes = raw["w_lin"].shape[1]
    b_lin = jnp.full((1, LANE), NEG_INF, jnp.float32)
    b_lin = b_lin.at[0, :num_classes].set(raw["b_lin"].astype(jnp.float32))

    def stack_ih(w):            # (4*hid, in) -> (LANE, 4*hid), gates along lanes
        return _pad_to(w.T.astype(jnp.float32), (LANE, GATES))

    def stack_hh(w):            # (4*hid, hid) -> (hid, 4*hid)
        return w.T.astype(jnp.float32)

    def stack_b(b_ih, b_hh):    # -> (1, 4*hid)
        return (b_ih + b_hh).astype(jnp.float32)[None, :]

    return {
        # GCN / Linear weights stay f32 so the epilogue matmul preserves the
        # f32 accumulator precision (they are tiny and VMEM-resident).
        "w1": _pad_to(raw["w1"].astype(jnp.float32), (LANE, LANE)),
        "b1": _pad_to(raw["b1"].astype(jnp.float32)[None, :], (1, LANE)),
        "w2": _pad_to(raw["w2"].astype(jnp.float32), (LANE, LANE)),
        "b2": _pad_to(raw["b2"].astype(jnp.float32)[None, :], (1, LANE)),
        "w_lin": _pad_to(raw["w_lin"].astype(jnp.float32), (LANE, LANE)),
        "b_lin": b_lin,
        "wih_f": stack_ih(raw["lstm_w_ih_f"]),
        "whh_f": stack_hh(raw["lstm_w_hh_f"]),
        "bg_f": stack_b(raw["lstm_b_ih_f"], raw["lstm_b_hh_f"]),
        "wih_b": stack_ih(raw["lstm_w_ih_b"]),
        "whh_b": stack_hh(raw["lstm_w_hh_b"]),
        "bg_b": stack_b(raw["lstm_b_ih_b"], raw["lstm_b_hh_b"]),
        "aw_f": raw["att_w"][:hid, 0][None, :].astype(jnp.float32),
        "aw_b": raw["att_w"][hid:, 0][None, :].astype(jnp.float32),
        "ab": raw["att_b"].reshape(1, 1).astype(jnp.float32),
    }


def gcn_jknet_forward(x, edge_index, raw_params, *, tile_m=512, tile_k=512):
    n = x.shape[0]
    num_classes = raw_params["w_lin"].shape[1]
    p = prepare_params(raw_params)

    # Tile selection: 512x512 default (HBM-roofline sweet spot), clamped for
    # tiny graphs so padding does not blow up.
    np_128 = _round_up(n, LANE)
    tile_m = min(tile_m, np_128)
    tile_k = min(tile_k, np_128)
    np_ = _round_up(np_128, max(tile_m, tile_k))

    # Keep the activation operand fully VMEM-resident when it fits (<= ~8 MiB
    # double-buffered); otherwise stream it over the reduction axis.
    x_resident = np_ * LANE * 2 * 2 <= (8 << 20)

    adj = _pad_to(build_gcn_adj(edge_index, n), (np_, np_)).astype(jnp.bfloat16)
    x_p = _pad_to(x.astype(jnp.float32), (np_, LANE)).astype(jnp.bfloat16)

    # GCNConv(F,16) + ReLU   (Dropout(p=0.5) is identity in eval mode)
    # TODO(synk): training-mode Dropout (pltpu.prng_seed / prng_random_bits) not applied.
    h1 = _agg_layer(adj, x_p, p["w1"], p["b1"], epilogue="relu",
                    out_dtype=jnp.bfloat16, tile_m=tile_m, tile_k=tile_k,
                    x_resident=x_resident)
    # GCNConv(16,16) + ReLU fused with JumpingKnowledge('lstm') over [x1, x2]:
    # h2 is produced and consumed inside the epilogue, xjk is the only output.
    xjk = _agg_jk_layer(adj, h1, p, tile_m=tile_m, tile_k=tile_k,
                        x_resident=x_resident, out_dtype=jnp.bfloat16)
    # APPNP(K=1, alpha=0) == one A_hat propagation, fused with Linear(16,C) + LogSoftmax
    logp = _agg_layer(adj, xjk, p["w_lin"], p["b_lin"], epilogue="log_softmax",
                      out_dtype=jnp.float32, tile_m=tile_m, tile_k=tile_k,
                      x_resident=x_resident)
    return logp[:n, :num_classes]


# ---------------------------------------------------------------------------
# Pure-JAX f32 reference (same math, unpadded) for a loose correctness check
# ---------------------------------------------------------------------------
def reference_forward(x, edge_index, raw):
    n = x.shape[0]
    adj = build_gcn_adj(edge_index, n)
    h1 = jax.nn.relu(adj @ (x @ raw["w1"]) + raw["b1"])
    h2 = jax.nn.relu(adj @ (h1 @ raw["w2"]) + raw["b2"])

    def run_lstm(seq, w_ih, w_hh, b_ih, b_hh):
        hid = w_hh.shape[1]
        h = jnp.zeros((n, hid), jnp.float32)
        c = jnp.zeros((n, hid), jnp.float32)
        outs = []
        for xt in seq:
            gates = xt @ w_ih.T + h @ w_hh.T + b_ih + b_hh
            i, f, g, o = jnp.split(gates, 4, axis=1)
            i, f, o = jax.nn.sigmoid(i), jax.nn.sigmoid(f), jax.nn.sigmoid(o)
            g = jnp.tanh(g)
            c = f * c + i * g
            h = o * jnp.tanh(c)
            outs.append(h)
        return outs

    fwd = run_lstm([h1, h2], raw["lstm_w_ih_f"], raw["lstm_w_hh_f"],
                   raw["lstm_b_ih_f"], raw["lstm_b_hh_f"])
    bwd = run_lstm([h2, h1], raw["lstm_w_ih_b"], raw["lstm_w_hh_b"],
                   raw["lstm_b_ih_b"], raw["lstm_b_hh_b"])
    o0 = jnp.concatenate([fwd[0], bwd[1]], axis=1)
    o1 = jnp.concatenate([fwd[1], bwd[0]], axis=1)
    att = jnp.concatenate([o0 @ raw["att_w"] + raw["att_b"],
                           o1 @ raw["att_w"] + raw["att_b"]], axis=1)
    alpha = jax.nn.softmax(att, axis=1)
    xjk = alpha[:, 0:1] * h1 + alpha[:, 1:2] * h2
    z = (adj @ xjk) @ raw["w_lin"] + raw["b_lin"]
    return jax.nn.log_softmax(z, axis=1)


if __name__ == "__main__":
    key = jax.random.PRNGKey(0)
    n_nodes, in_dim, num_classes = 200, 12, 4
    keys = jax.random.split(key, 16)

    def glorot(k, shape):
        lim = (6.0 / (shape[0] + shape[1])) ** 0.5
        return jax.random.uniform(k, shape, jnp.float32, -lim, lim)

    def unif(k, shape, scale):
        return jax.random.uniform(k, shape, jnp.float32, -scale, scale)

    s = 1.0 / (JK_HID ** 0.5)
    raw = {
        "w1": glorot(keys[0], (in_dim, HIDDEN)),
        "b1": jnp.zeros((HIDDEN,), jnp.float32),
        "w2": glorot(keys[1], (HIDDEN, HIDDEN)),
        "b2": jnp.zeros((HIDDEN,), jnp.float32),
        "lstm_w_ih_f": unif(keys[2], (4 * JK_HID, HIDDEN), s),
        "lstm_w_hh_f": unif(keys[3], (4 * JK_HID, JK_HID), s),
        "lstm_b_ih_f": unif(keys[4], (4 * JK_HID,), s),
        "lstm_b_hh_f": unif(keys[5], (4 * JK_HID,), s),
        "lstm_w_ih_b": unif(keys[6], (4 * JK_HID, HIDDEN), s),
        "lstm_w_hh_b": unif(keys[7], (4 * JK_HID, JK_HID), s),
        "lstm_b_ih_b": unif(keys[8], (4 * JK_HID,), s),
        "lstm_b_hh_b": unif(keys[9], (4 * JK_HID,), s),
        "att_w": glorot(keys[10], (2 * JK_HID, 1)),
        "att_b": jnp.zeros((1,), jnp.float32),
        "w_lin": glorot(keys[11], (HIDDEN, num_classes)),
        "b_lin": jnp.zeros((num_classes,), jnp.float32),
    }

    x = jax.random.normal(keys[12], (n_nodes, in_dim), jnp.float32)
    # deterministic undirected ring graph: i <-> (i+1) % n
    src = jnp.arange(n_nodes, dtype=jnp.int32)
    dst = (src + 1) % n_nodes
    edge_index = jnp.stack([jnp.concatenate([src, dst]),
                            jnp.concatenate([dst, src])], axis=0)

    out = gcn_jknet_forward(x, edge_index, raw)
    out = jax.block_until_ready(out)

    assert out.shape == (n_nodes, num_classes)
    assert bool(jnp.all(jnp.isfinite(out)))
    # rows are log-probabilities
    assert jnp.allclose(jnp.exp(out).sum(axis=1), 1.0, atol=1e-3)
    # loose check vs pure-JAX f32 reference (aggregation uses bf16 MXU operands)
    ref = reference_forward(x, edge_index, raw)
    max_err = float(jnp.max(jnp.abs(out - ref)))
    assert max_err < 0.2, f"max abs err vs reference: {max_err}"
    print("KERNEL_OK")
</pallas_src>

<mosaic_0001>
module attributes {stable_mosaic.version = 11 : i64} {
  func.func @_agg_kernel(%arg0: i32, %arg1: i32, %arg2: memref<256x256xbf16, #tpu.memory_space<vmem>>, %arg3: memref<256x128xbf16, #tpu.memory_space<vmem>>, %arg4: memref<128x128xf32, #tpu.memory_space<vmem>>, %arg5: memref<1x128xf32, #tpu.memory_space<vmem>>, %arg6: memref<256x128xbf16, #tpu.memory_space<vmem>>, %arg7: memref<256x128xf32, #tpu.memory_space<vmem>>) attributes {dimension_semantics = [#tpu.dimension_semantics<parallel>, #tpu.dimension_semantics<arbitrary>], iteration_bounds = array<i64: 1, 1>, scalar_prefetch = 0 : i64, scratch_operands = 1 : i64, tpu.core_type = #tpu.core_type<tc>, window_params = [{transform_indices = @transform_0, window_bounds = array<i64: 256, 256>}, {pipeline_mode = #tpu.pipeline_mode<synchronous>, transform_indices = @transform_1, window_bounds = array<i64: 256, 128>}, {pipeline_mode = #tpu.pipeline_mode<synchronous>, transform_indices = @transform_2, window_bounds = array<i64: 128, 128>}, {pipeline_mode = #tpu.pipeline_mode<synchronous>, transform_indices = @transform_3, window_bounds = array<i64: 1, 128>}, {transform_indices = @transform_4, window_bounds = array<i64: 256, 128>}]} {
    %c0_i32 = arith.constant 0 : i32
    %0 = arith.cmpi eq, %arg1, %c0_i32 : i32
    %1 = arith.extui %0 : i1 to i32
    %c0_i32_0 = arith.constant 0 : i32
    %2 = arith.cmpi ne, %1, %c0_i32_0 : i32
    scf.if %2 {
      %cst_9 = arith.constant 0.000000e+00 : f32
      %15 = vector.broadcast %cst_9 : f32 to vector<256x128xf32>
      %c0_10 = arith.constant 0 : index
      %c0_11 = arith.constant 0 : index
      %16 = vector.load %arg7[%c0_10, %c0_11] : memref<256x128xf32, #tpu.memory_space<vmem>>, vector<256x128xf32>
      tpu.vector_store %arg7[%c0_10, %c0_11], %15 {strides = array<i32>} : memref<256x128xf32, #tpu.memory_space<vmem>>, vector<256x128xf32>,
    } else {
    }
    %c256_i32 = arith.constant 256 : i32
    %3 = arith.muli %arg1, %c256_i32 : i32
    %4 = tpu.assume_multiple %3, 256 : i32
    %5 = arith.index_cast %4 : i32 to index
    %c0 = arith.constant 0 : index
    %6 = vector.load %arg3[%5, %c0] : memref<256x128xbf16, #tpu.memory_space<vmem>>, vector<256x128xbf16>
    %c0_1 = arith.constant 0 : index
    %c0_2 = arith.constant 0 : index
    %7 = vector.load %arg7[%c0_1, %c0_2] : memref<256x128xf32, #tpu.memory_space<vmem>>, vector<256x128xf32>
    %c0_3 = arith.constant 0 : index
    %c0_4 = arith.constant 0 : index
    %8 = vector.load %arg2[%c0_3, %c0_4] : memref<256x256xbf16, #tpu.memory_space<vmem>>, vector<256x256xbf16>
    %cst = arith.constant dense<0.000000e+00> : vector<256x128xf32>
    %9 = tpu.matmul %8, %6, %cst {dimension_numbers = #tpu.dot_dimension_numbers<[1], [0], [0], [1], [0, 0, 1, 1], [], []>} : vector<256x256xbf16>, vector<256x128xbf16>, vector<256x128xf32> -> vector<256x128xf32>
    %10 = arith.addf %7, %9 : vector<256x128xf32>
    %c0_5 = arith.constant 0 : index
    %c0_6 = arith.constant 0 : index
    %11 = vector.load %arg7[%c0_5, %c0_6] : memref<256x128xf32, #tpu.memory_space<vmem>>, vector<256x128xf32>
    tpu.vector_store %arg7[%c0_5, %c0_6], %10 {strides = array<i32>} : memref<256x128xf32, #tpu.memory_space<vmem>>, vector<256x128xf32>,
    %c0_i32_7 = arith.constant 0 : i32
    %12 = arith.cmpi eq, %arg1, %c0_i32_7 : i32
    %13 = arith.extui %12 : i1 to i32
    %c0_i32_8 = arith.constant 0 : i32
    %14 = arith.cmpi ne, %13, %c0_i32_8 : i32
    scf.if %14 {
      %c0_9 = arith.constant 0 : index
      %c0_10 = arith.constant 0 : index
      %15 = vector.load %arg7[%c0_9, %c0_10] : memref<256x128xf32, #tpu.memory_space<vmem>>, vector<256x128xf32>
      %c0_11 = arith.constant 0 : index
      %c0_12 = arith.constant 0 : index
      %16 = vector.load %arg4[%c0_11, %c0_12] : memref<128x128xf32, #tpu.memory_space<vmem>>, vector<128x128xf32>
      %cst_13 = arith.constant dense<0.000000e+00> : vector<256x128xf32>
      %17 = tpu.matmul %15, %16, %cst_13 {dimension_numbers = #tpu.dot_dimension_numbers<[1], [0], [0], [1], [0, 0, 1, 1], [], []>} : vector<256x128xf32>, vector<128x128xf32>, vector<256x128xf32> -> vector<256x128xf32>
      %c0_14 = arith.constant 0 : index
      %c0_15 = arith.constant 0 : index
      %18 = vector.load %arg5[%c0_14, %c0_15] : memref<1x128xf32, #tpu.memory_space<vmem>>, vector<1x128xf32>
      %19 = vector.broadcast %18 : vector<1x128xf32> to vector<256x128xf32>
      %20 = arith.addf %17, %19 : vector<256x128xf32>
      %cst_16 = arith.constant 0.000000e+00 : f32
      %21 = vector.broadcast %cst_16 : f32 to vector<256x128xf32>
      %22 = arith.maximumf %20, %21 : vector<256x128xf32>
      %23 = arith.truncf %22 : vector<256x128xf32> to vector<256x128xbf16>
      %c0_17 = arith.constant 0 : index
      %c0_18 = arith.constant 0 : index
      %24 = vector.load %arg6[%c0_17, %c0_18] : memref<256x128xbf16, #tpu.memory_space<vmem>>, vector<256x128xbf16>
      tpu.vector_store %arg6[%c0_17, %c0_18], %23 {strides = array<i32>} : memref<256x128xbf16, #tpu.memory_space<vmem>>, vector<256x128xbf16>,
    } else {
    }
    return
  }
  func.func @transform_0(%arg0: i32, %arg1: i32) -> (i32, i32) {
    %c0_i32 = arith.constant 0 : i32
    return %arg0, %arg1 : i32, i32
  }
  func.func @transform_1(%arg0: i32, %arg1: i32) -> (i32, i32) {
    %c0_i32 = arith.constant 0 : i32
    %c0_i32_0 = arith.constant 0 : i32
    %c0_i32_1 = arith.constant 0 : i32
    return %c0_i32, %c0_i32_0 : i32, i32
  }
  func.func @transform_2(%arg0: i32, %arg1: i32) -> (i32, i32) {
    %c0_i32 = arith.constant 0 : i32
    %c0_i32_0 = arith.constant 0 : i32
    %c0_i32_1 = arith.constant 0 : i32
    return %c0_i32, %c0_i32_0 : i32, i32
  }
  func.func @transform_3(%arg0: i32, %arg1: i32) -> (i32, i32) {
    %c0_i32 = arith.constant 0 : i32
    %c0_i32_0 = arith.constant 0 : i32
    %c0_i32_1 = arith.constant 0 : i32
    return %c0_i32, %c0_i32_0 : i32, i32
  }
  func.func @transform_4(%arg0: i32, %arg1: i32) -> (i32, i32) {
    %c0_i32 = arith.constant 0 : i32
    %c0_i32_0 = arith.constant 0 : i32
    return %arg0, %c0_i32 : i32, i32
  }
}

</mosaic_0001>

<llo_original>
// kernel: tpu_custom_call.1
$region0: #{tpu_custom_call.1}
  #allocation0 [shape = 'u32[]', space=smem, size = 0x4, offset = 0x4, fixed_abs, tag = 'smem constant byte address 0x4 - core index']
  #allocation1 [shape = 'u32[144,128]{1,0:T(1,128)}', space=vmem, size = 0x12000, scoped, tag = 'internal scratch']
  #allocation2 [shape = 'f32[256,128]{1,0:T(8,128)}', space=vmem, size = 0x20000, scoped, tag = 'scratch operand']
  %s0 = inlined_call_operand.hbm [shape: bf16[256,256], index: 0, kind: input, shape index: {}]
  %s1 = inlined_call_operand.hbm [shape: bf16[256,128], index: 1, kind: input, shape index: {}]
  %s2 = inlined_call_operand.hbm [shape: f32[128,128], index: 2, kind: input, shape index: {}]
  %s3 = inlined_call_operand.vmem [shape: f32[1,128], index: 3, kind: input, shape index: {}]
  %s4 = inlined_call_operand.hbm [shape: bf16[256,128], index: 4, kind: output, shape index: {}]
  %s5 = sld [smem:[#allocation0]]
  $region46: #{tpu_custom_call.1} parent=0
    _
  %s7 = ssub.s32 1, %s5
  %s8 = scalar_select 0, %s7, %s5
  $region1: #{tpu_custom_call.1} parent=0
    #allocation3 [shape = 'u8[131072]{0}', space=vmem, size = 0x20000, scoped, tag = 'input window, operand 0, single buffered']
    #allocation4 [shape = 's32[1]{0}', space=sflag, size = 0x4, scoped, tag = 'scoped memory for tpu_custom_call.1']
    #allocation5 [shape = 's32[1]{0}', space=sflag, size = 0x4, scoped, tag = 'scoped memory for tpu_custom_call.1']
    #allocation6 [shape = 'u8[65536]{0}', space=vmem, size = 0x10000, scoped, tag = 'input window, operand 1, single buffered']
    #allocation7 [shape = 's32[1]{0}', space=sflag, size = 0x4, scoped, tag = 'scoped memory for tpu_custom_call.1']
    #allocation8 [shape = 'u8[65536]{0}', space=vmem, size = 0x10000, scoped, tag = 'input window, operand 2, single buffered']
    #allocation9 [shape = 'u8[65536]{0}', space=vmem, size = 0x10000, scoped, tag = 'output window, operand 0, single buffered']
    %9 = vsyncpa [#allocation4], 0
    %10 = vsyncpa [#allocation7], 0
    %11 = vsyncpa [#allocation5], 0
    // Predicated region
    $region2: #{tpu_custom_call.1} parent=1 // pred_check
      _
    $region3: #{tpu_custom_call.1} parent=1 // pred_check_branch
      %13 = sbr.rel (0) target = $region5
    $region4: #{tpu_custom_call.1} parent=1 // pred_region
      %s15 = ssub.s32 4096, 4096
      %16 = vsyncadd [#allocation4], %s15
      %s17 = sshll.u32 [#allocation3], 4
      %s18 = int_to_ptr.vmem [resolvable:$true] %s17
      %23 = dma.hbm_to_vmem [thread:$0]  %s0, 4096, %s18, [#allocation4], 128, 128, 8
    $region5: #{tpu_custom_call.1} parent=1 // pred_fallthru
      _
    // Predicated region
    $region6: #{tpu_custom_call.1} parent=1 // pred_check
      _
    $region7: #{tpu_custom_call.1} parent=1 // pred_check_branch
      %25 = sbr.rel (0) target = $region9
    $region8: #{tpu_custom_call.1} parent=1 // pred_region
      %s27 = ssub.s32 2048, 2048
      %28 = vsyncadd [#allocation7], %s27
      %s29 = sshll.u32 [#allocation6], 4
      %s30 = int_to_ptr.vmem [resolvable:$true] %s29
      %35 = dma.hbm_to_vmem [thread:$0]  %s1, 2048, %s30, [#allocation7], 64, 64, 4
    $region9: #{tpu_custom_call.1} parent=1 // pred_fallthru
      _
    // Predicated region
    $region10: #{tpu_custom_call.1} parent=1 // pred_check
      _
    $region11: #{tpu_custom_call.1} parent=1 // pred_check_branch
      %37 = sbr.rel (0) target = $region13
    $region12: #{tpu_custom_call.1} parent=1 // pred_region
      %s39 = ssub.s32 2048, 2048
      %40 = vsyncadd [#allocation7], %s39
      %s41 = sshll.u32 [#allocation8], 4
      %s42 = int_to_ptr.vmem [resolvable:$true] %s41
      %47 = dma.hbm_to_vmem [thread:$0]  %s2, 2048, %s42, [#allocation7], 128, 128, 8
    $region13: #{tpu_custom_call.1} parent=1 // pred_fallthru
      _
    // Predicated region
    $region14: #{tpu_custom_call.1} parent=1 // pred_check
      _
    $region15: #{tpu_custom_call.1} parent=1 // pred_check_branch
      %49 = sbr.rel (0) target = $region17
    $region16: #{tpu_custom_call.1} parent=1 // pred_region
      _
    $region17: #{tpu_custom_call.1} parent=1 // pred_fallthru
      _
    // Predicated region
    $region18: #{tpu_custom_call.1} parent=1 // pred_check
      _
    $region19: #{tpu_custom_call.1} parent=1 // pred_check_branch
      %51 = sbr.rel (0) target = $region21
    $region20: #{tpu_custom_call.1} parent=1 // pred_region
      %52 = dma.done [#allocation4], 4096
    $region21: #{tpu_custom_call.1} parent=1 // pred_fallthru
      _
    // Predicated region
    $region22: #{tpu_custom_call.1} parent=1 // pred_check
      _
    $region23: #{tpu_custom_call.1} parent=1 // pred_check_branch
      %54 = sbr.rel (0) target = $region25
    $region24: #{tpu_custom_call.1} parent=1 // pred_region
      %55 = dma.done [#allocation7], 2048
    $region25: #{tpu_custom_call.1} parent=1 // pred_fallthru
      _
    // Predicated region
    $region26: #{tpu_custom_call.1} parent=1 // pred_check
      _
    $region27: #{tpu_custom_call.1} parent=1 // pred_check_branch
      %57 = sbr.rel (0) target = $region29
    $region28: #{tpu_custom_call.1} parent=1 // pred_region
      %58 = dma.done [#allocation7], 2048
    $region29: #{tpu_custom_call.1} parent=1 // pred_fallthru
      _
    %p60 = scmp.eq.s32.totalorder 0, 0
    // Predicated region
    $region30: #{tpu_custom_call.1} parent=1 // pred_check
      %p61 = pneg %p60
    $region31: #{tpu_custom_call.1} parent=1 // pred_check_branch
      %63 = sbr.rel (%p61) target = $region33
    $region32: #{tpu_custom_call.1} parent=1 // pred_region
      %64 = vst [vmem:[#allocation2] sm:$0xff] 0.0
      %65 = vst [vmem:[#allocation2 + $0x8] sm:$0xff] 0.0
      %66 = vst [vmem:[#allocation2 + $0x10] sm:$0xff] 0.0
      %67 = vst [vmem:[#allocation2 + $0x18] sm:$0xff] 0.0
      %68 = vst [vmem:[#allocation2 + $0x20] sm:$0xff] 0.0
      %69 = vst [vmem:[#allocation2 + $0x28] sm:$0xff] 0.0
      %70 = vst [vmem:[#allocation2 + $0x30] sm:$0xff] 0.0
      %71 = vst [vmem:[#allocation2 + $0x38] sm:$0xff] 0.0
      %72 = vst [vmem:[#allocation2 + $0x40] sm:$0xff] 0.0
      %73 = vst [vmem:[#allocation2 + $0x48] sm:$0xff] 0.0
      %74 = vst [vmem:[#allocation2 + $0x50] sm:$0xff] 0.0
      %75 = vst [vmem:[#allocation2 + $0x58] sm:$0xff] 0.0
      %76 = vst [vmem:[#allocation2 + $0x60] sm:$0xff] 0.0
      %77 = vst [vmem:[#allocation2 + $0x68] sm:$0xff] 0.0
      %78 = vst [vmem:[#allocation2 + $0x70] sm:$0xff] 0.0
      %79 = vst [vmem:[#allocation2 + $0x78] sm:$0xff] 0.0
      %80 = vst [vmem:[#allocation2 + $0x80] sm:$0xff] 0.0
      %81 = vst [vmem:[#allocation2 + $0x88] sm:$0xff] 0.0
      %82 = vst [vmem:[#allocation2 + $0x90] sm:$0xff] 0.0
      %83 = vst [vmem:[#allocation2 + $0x98] sm:$0xff] 0.0
      %84 = vst [vmem:[#allocation2 + $0xa0] sm:$0xff] 0.0
      %85 = vst [vmem:[#allocation2 + $0xa8] sm:$0xff] 0.0
      %86 = vst [vmem:[#allocation2 + $0xb0] sm:$0xff] 0.0
      %87 = vst [vmem:[#allocation2 + $0xb8] sm:$0xff] 0.0
      %88 = vst [vmem:[#allocation2 + $0xc0] sm:$0xff] 0.0
      %89 = vst [vmem:[#allocation2 + $0xc8] sm:$0xff] 0.0
      %90 = vst [vmem:[#allocation2 + $0xd0] sm:$0xff] 0.0
      %91 = vst [vmem:[#allocation2 + $0xd8] sm:$0xff] 0.0
      %92 = vst [vmem:[#allocation2 + $0xe0] sm:$0xff] 0.0
      %93 = vst [vmem:[#allocation2 + $0xe8] sm:$0xff] 0.0
      %94 = vst [vmem:[#allocation2 + $0xf0] sm:$0xff] 0.0
      %95 = vst [vmem:[#allocation2 + $0xf8] sm:$0xff] 0.0
    $region33: #{tpu_custom_call.1} parent=1 // pred_fallthru
      _
    %s96 = smul.u32 0, 256
    %s97 = sshra.s32 %s96, 3
    %s98 = sand.u32 %s96, 7
    %s99 = smul.addr %s97, 4
    %s100 = scalar_lea.vmem [#allocation6], %s99
    %v101 = vld [vmem:[%s100] sm:$0xf]
    %v102 = vld [vmem:[%s100 + $0x4] sm:$0xf]
    %v103 = vld [vmem:[%s100 + $0x8] sm:$0xf]
    %v104 = vld [vmem:[%s100 + $0xc] sm:$0xf]
    %v105 = vld [vmem:[%s100 + $0x10] sm:$0xf]
    %v106 = vld [vmem:[%s100 + $0x14] sm:$0xf]
    %v107 = vld [vmem:[%s100 + $0x18] sm:$0xf]
    %v108 = vld [vmem:[%s100 + $0x1c] sm:$0xf]
    %v109 = vld [vmem:[%s100 + $0x20] sm:$0xf]
    %v110 = vld [vmem:[%s100 + $0x24] sm:$0xf]
    %v111 = vld [vmem:[%s100 + $0x28] sm:$0xf]
    %v112 = vld [vmem:[%s100 + $0x2c] sm:$0xf]
    %v113 = vld [vmem:[%s100 + $0x30] sm:$0xf]
    %v114 = vld [vmem:[%s100 + $0x34] sm:$0xf]
    %v115 = vld [vmem:[%s100 + $0x38] sm:$0xf]
    %v116 = vld [vmem:[%s100 + $0x3c] sm:$0xf]
    %v117 = vld [vmem:[%s100 + $0x40] sm:$0xf]
    %v118 = vld [vmem:[%s100 + $0x44] sm:$0xf]
    %v119 = vld [vmem:[%s100 + $0x48] sm:$0xf]
    %v120 = vld [vmem:[%s100 + $0x4c] sm:$0xf]
    %v121 = vld [vmem:[%s100 + $0x50] sm:$0xf]
    %v122 = vld [vmem:[%s100 + $0x54] sm:$0xf]
    %v123 = vld [vmem:[%s100 + $0x58] sm:$0xf]
    %v124 = vld [vmem:[%s100 + $0x5c] sm:$0xf]
    %v125 = vld [vmem:[%s100 + $0x60] sm:$0xf]
    %v126 = vld [vmem:[%s100 + $0x64] sm:$0xf]
    %v127 = vld [vmem:[%s100 + $0x68] sm:$0xf]
    %v128 = vld [vmem:[%s100 + $0x6c] sm:$0xf]
    %v129 = vld [vmem:[%s100 + $0x70] sm:$0xf]
    %v130 = vld [vmem:[%s100 + $0x74] sm:$0xf]
    %v131 = vld [vmem:[%s100 + $0x78] sm:$0xf]
    %v132 = vld [vmem:[%s100 + $0x7c] sm:$0xf]
    %v133 = vld [vmem:[#allocation2] sm:$0xff]
    %v134 = vld [vmem:[#allocation2 + $0x8] sm:$0xff]
    %v135 = vld [vmem:[#allocation2 + $0x10] sm:$0xff]
    %v136 = vld [vmem:[#allocation2 + $0x18] sm:$0xff]
    %v137 = vld [vmem:[#allocation2 + $0x20] sm:$0xff]
    %v138 = vld [vmem:[#allocation2 + $0x28] sm:$0xff]
    %v139 = vld [vmem:[#allocation2 + $0x30] sm:$0xff]
    %v140 = vld [vmem:[#allocation2 + $0x38] sm:$0xff]
    %v141 = vld [vmem:[#allocation2 + $0x40] sm:$0xff]
    %v142 = vld [vmem:[#allocation2 + $0x48] sm:$0xff]
    %v143 = vld [vmem:[#allocation2 + $0x50] sm:$0xff]
    %v144 = vld [vmem:[#allocation2 + $0x58] sm:$0xff]
    %v145 = vld [vmem:[#allocation2 + $0x60] sm:$0xff]
    %v146 = vld [vmem:[#allocation2 + $0x68] sm:$0xff]
    %v147 = vld [vmem:[#allocation2 + $0x70] sm:$0xff]
    %v148 = vld [vmem:[#allocation2 + $0x78] sm:$0xff]
    %v149 = vld [vmem:[#allocation2 + $0x80] sm:$0xff]
    %v150 = vld [vmem:[#allocation2 + $0x88] sm:$0xff]
    %v151 = vld [vmem:[#allocation2 + $0x90] sm:$0xff]
    %v152 = vld [vmem:[#allocation2 + $0x98] sm:$0xff]
    %v153 = vld [vmem:[#allocation2 + $0xa0] sm:$0xff]
    %v154 = vld [vmem:[#allocation2 + $0xa8] sm:$0xff]
    %v155 = vld [vmem:[#allocation2 + $0xb0] sm:$0xff]
    %v156 = vld [vmem:[#allocation2 + $0xb8] sm:$0xff]
    %v157 = vld [vmem:[#allocation2 + $0xc0] sm:$0xff]
    %v158 = vld [vmem:[#allocation2 + $0xc8] sm:$0xff]
    %v159 = vld [vmem:[#allocation2 + $0xd0] sm:$0xff]
    %v160 = vld [vmem:[#allocation2 + $0xd8] sm:$0xff]
    %v161 = vld [vmem:[#allocation2 + $0xe0] sm:$0xff]
    %v162 = vld [vmem:[#allocation2 + $0xe8] sm:$0xff]
    %v163 = vld [vmem:[#allocation2 + $0xf0] sm:$0xff]
    %v164 = vld [vmem:[#allocation2 + $0xf8] sm:$0xff]
    %v165 = vld [vmem:[#allocation3] sm:$0xff]
    %v166 = vld [vmem:[#allocation3 + $0x8] sm:$0xff]
    %v167 = vld [vmem:[#allocation3 + $0x10] sm:$0xff]
    %v168 = vld [vmem:[#allocation3 + $0x18] sm:$0xff]
    %v169 = vld [vmem:[#allocation3 + $0x20] sm:$0xff]
    %v170 = vld [vmem:[#allocation3 + $0x28] sm:$0xff]
    %v171 = vld [vmem:[#allocation3 + $0x30] sm:$0xff]
    %v172 = vld [vmem:[#allocation3 + $0x38] sm:$0xff]
    %v173 = vld [vmem:[#allocation3 + $0x40] sm:$0xff]
    %v174 = vld [vmem:[#allocation3 + $0x48] sm:$0xff]
    %v175 = vld [vmem:[#allocation3 + $0x50] sm:$0xff]
    %v176 = vld [vmem:[#allocation3 + $0x58] sm:$0xff]
    %v177 = vld [vmem:[#allocation3 + $0x60] sm:$0xff]
    %v178 = vld [vmem:[#allocation3 + $0x68] sm:$0xff]
    %v179 = vld [vmem:[#allocation3 + $0x70] sm:$0xff]
    %v180 = vld [vmem:[#allocation3 + $0x78] sm:$0xff]
    %v181 = vld [vmem:[#allocation3 + $0x80] sm:$0xff]
    %v182 = vld [vmem:[#allocation3 + $0x88] sm:$0xff]
    %v183 = vld [vmem:[#allocation3 + $0x90] sm:$0xff]
    %v184 = vld [vmem:[#allocation3 + $0x98] sm:$0xff]
    %v185 = vld [vmem:[#allocation3 + $0xa0] sm:$0xff]
    %v186 = vld [vmem:[#allocation3 + $0xa8] sm:$0xff]
    %v187 = vld [vmem:[#allocation3 + $0xb0] sm:$0xff]
    %v188 = vld [vmem:[#allocation3 + $0xb8] sm:$0xff]
    %v189 = vld [vmem:[#allocation3 + $0xc0] sm:$0xff]
    %v190 = vld [vmem:[#allocation3 + $0xc8] sm:$0xff]
    %v191 = vld [vmem:[#allocation3 + $0xd0] sm:$0xff]
    %v192 = vld [vmem:[#allocation3 + $0xd8] sm:$0xff]
    %v193 = vld [vmem:[#allocation3 + $0xe0] sm:$0xff]
    %v194 = vld [vmem:[#allocation3 + $0xe8] sm:$0xff]
    %v195 = vld [vmem:[#allocation3 + $0xf0] sm:$0xff]
    %v196 = vld [vmem:[#allocation3 + $0xf8] sm:$0xff]
    %v229 = vunpack.c.l.b16 %v165
    %v230 = vunpack.c.h.b16 %v165
    %v231 = vunpack.c.l.b16 %v166
    %v232 = vunpack.c.h.b16 %v166
    %v233 = vunpack.c.l.b16 %v167
    %v234 = vunpack.c.h.b16 %v167
    %v235 = vunpack.c.l.b16 %v168
    %v236 = vunpack.c.h.b16 %v168
    %v237 = vunpack.c.l.b16 %v169
    %v238 = vunpack.c.h.b16 %v169
    %v239 = vunpack.c.l.b16 %v170
    %v240 = vunpack.c.h.b16 %v170
    %v241 = vunpack.c.l.b16 %v171
    %v242 = vunpack.c.h.b16 %v171
    %v243 = vunpack.c.l.b16 %v172
    %v244 = vunpack.c.h.b16 %v172
    %v245 = vunpack.c.l.b16 %v173
    %v246 = vunpack.c.h.b16 %v173
    %v247 = vunpack.c.l.b16 %v174
    %v248 = vunpack.c.h.b16 %v174
    %v249 = vunpack.c.l.b16 %v175
    %v250 = vunpack.c.h.b16 %v175
    %v251 = vunpack.c.l.b16 %v176
    %v252 = vunpack.c.h.b16 %v176
    %v253 = vunpack.c.l.b16 %v177
    %v254 = vunpack.c.h.b16 %v177
    %v255 = vunpack.c.l.b16 %v178
    %v256 = vunpack.c.h.b16 %v178
    %v257 = vunpack.c.l.b16 %v179
    %v258 = vunpack.c.h.b16 %v179
    %v259 = vunpack.c.l.b16 %v180
    %v260 = vunpack.c.h.b16 %v180
    %v261 = vunpack.c.l.b16 %v181
    %v262 = vunpack.c.h.b16 %v181
    %v263 = vunpack.c.l.b16 %v182
    %v264 = vunpack.c.h.b16 %v182
    %v265 = vunpack.c.l.b16 %v183
    %v266 = vunpack.c.h.b16 %v183
    %v267 = vunpack.c.l.b16 %v184
    %v268 = vunpack.c.h.b16 %v184
    %v269 = vunpack.c.l.b16 %v185
    %v270 = vunpack.c.h.b16 %v185
    %v271 = vunpack.c.l.b16 %v186
    %v272 = vunpack.c.h.b16 %v186
    %v273 = vunpack.c.l.b16 %v187
    %v274 = vunpack.c.h.b16 %v187
    %v275 = vunpack.c.l.b16 %v188
    %v276 = vunpack.c.h.b16 %v188
    %v277 = vunpack.c.l.b16 %v189
    %v278 = vunpack.c.h.b16 %v189
    %v279 = vunpack.c.l.b16 %v190
    %v280 = vunpack.c.h.b16 %v190
    %v281 = vunpack.c.l.b16 %v191
    %v282 = vunpack.c.h.b16 %v191
    %v283 = vunpack.c.l.b16 %v192
    %v284 = vunpack.c.h.b16 %v192
    %v285 = vunpack.c.l.b16 %v193
    %v286 = vunpack.c.h.b16 %v193
    %v287 = vunpack.c.l.b16 %v194
    %v288 = vunpack.c.h.b16 %v194
    %v289 = vunpack.c.l.b16 %v195
    %v290 = vunpack.c.h.b16 %v195
    %v291 = vunpack.c.l.b16 %v196
    %v292 = vunpack.c.h.b16 %v196
    %v293 = vpack.c.b16 %v231, %v229
    %v294 = vpack.c.b16 %v232, %v230
    %v295 = vpack.c.b16 %v235, %v233
    %v296 = vpack.c.b16 %v236, %v234
    %v297 = vpack.c.b16 %v239, %v237
    %v298 = vpack.c.b16 %v240, %v238
    %v299 = vpack.c.b16 %v243, %v241
    %v300 = vpack.c.b16 %v244, %v242
    %v301 = vpack.c.b16 %v247, %v245
    %v302 = vpack.c.b16 %v248, %v246
    %v303 = vpack.c.b16 %v251, %v249
    %v304 = vpack.c.b16 %v252, %v250
    %v305 = vpack.c.b16 %v255, %v253
    %v306 = vpack.c.b16 %v256, %v254
    %v307 = vpack.c.b16 %v259, %v257
    %v308 = vpack.c.b16 %v260, %v258
    %v309 = vpack.c.b16 %v263, %v261
    %v310 = vpack.c.b16 %v264, %v262
    %v311 = vpack.c.b16 %v267, %v265
    %v312 = vpack.c.b16 %v268, %v266
    %v313 = vpack.c.b16 %v271, %v269
    %v314 = vpack.c.b16 %v272, %v270
    %v315 = vpack.c.b16 %v275, %v273
    %v316 = vpack.c.b16 %v276, %v274
    %v317 = vpack.c.b16 %v279, %v277
    %v318 = vpack.c.b16 %v280, %v278
    %v319 = vpack.c.b16 %v283, %v281
    %v320 = vpack.c.b16 %v284, %v282
    %v321 = vpack.c.b16 %v287, %v285
    %v322 = vpack.c.b16 %v288, %v286
    %v323 = vpack.c.b16 %v291, %v289
    %v324 = vpack.c.b16 %v292, %v290
    %v389 = vunpack.c.l.b16 %v101
    %v390 = vunpack.c.l.b16 %v102
    %v391 = vunpack.c.l.b16 %v103
    %v392 = vunpack.c.l.b16 %v104
    %v393 = vunpack.c.l.b16 %v105
    %v394 = vunpack.c.l.b16 %v106
    %v395 = vunpack.c.l.b16 %v107
    %v396 = vunpack.c.l.b16 %v108
    %v397 = vunpack.c.l.b16 %v109
    %v398 = vunpack.c.l.b16 %v110
    %v399 = vunpack.c.l.b16 %v111
    %v400 = vunpack.c.l.b16 %v112
    %v401 = vunpack.c.l.b16 %v113
    %v402 = vunpack.c.l.b16 %v114
    %v403 = vunpack.c.l.b16 %v115
    %v404 = vunpack.c.l.b16 %v116
    %v405 = vunpack.c.l.b16 %v117
    %v406 = vunpack.c.l.b16 %v118
    %v407 = vunpack.c.l.b16 %v119
    %v408 = vunpack.c.l.b16 %v120
    %v409 = vunpack.c.l.b16 %v121
    %v410 = vunpack.c.l.b16 %v122
    %v411 = vunpack.c.l.b16 %v123
    %v412 = vunpack.c.l.b16 %v124
    %v413 = vunpack.c.l.b16 %v125
    %v414 = vunpack.c.l.b16 %v126
    %v415 = vunpack.c.l.b16 %v127
    %v416 = vunpack.c.l.b16 %v128
    %v417 = vunpack.c.l.b16 %v129
    %v418 = vunpack.c.l.b16 %v130
    %v419 = vunpack.c.l.b16 %v131
    %v420 = vunpack.c.l.b16 %v132
    %v421 = vpack.c.b16 %v390, %v389
    %v422 = vpack.c.b16 %v392, %v391
    %v423 = vpack.c.b16 %v394, %v393
    %v424 = vpack.c.b16 %v396, %v395
    %v425 = vpack.c.b16 %v398, %v397
    %v426 = vpack.c.b16 %v400, %v399
    %v427 = vpack.c.b16 %v402, %v401
    %v428 = vpack.c.b16 %v404, %v403
    %v429 = vpack.c.b16 %v406, %v405
    %v430 = vpack.c.b16 %v408, %v407
    %v431 = vpack.c.b16 %v410, %v409
    %v432 = vpack.c.b16 %v412, %v411
    %v433 = vpack.c.b16 %v414, %v413
    %v434 = vpack.c.b16 %v416, %v415
    %v435 = vpack.c.b16 %v418, %v417
    %v436 = vpack.c.b16 %v420, %v419
    %453 = vmatprep.subr.bf16.mxu0 0
    %454 = vmatpush1.bf16.msra.mxu0 %v428
    %455 = vmatprep.subr.bf16.mxu0 0
    %456 = vmatpush1.bf16.msra.mxu0 %v427
    %457 = vmatprep.subr.bf16.mxu0 0
    %458 = vmatpush1.bf16.msra.mxu0 %v426
    %459 = vmatprep.subr.bf16.mxu0 0
    %460 = vmatpush1.bf16.msra.mxu0 %v425
    %461 = vmatprep.subr.bf16.mxu0 0
    %462 = vmatpush1.bf16.msra.mxu0 %v424
    %463 = vmatprep.subr.bf16.mxu0 0
    %464 = vmatpush1.bf16.msra.mxu0 %v423
    %465 = vmatprep.subr.bf16.mxu0 0
    %466 = vmatpush1.bf16.msra.mxu0 %v422
    %467 = vmatprep.subr.bf16.mxu0 0
    %468 = vmatpush1.bf16.msra.mxu0 %v421
    %469 = vmatprep.subr.bf16.mxu0 0
    %470 = vmatpush2.bf16.msra.mxu0 %v436
    %471 = vmatprep.subr.bf16.mxu0 0
    %472 = vmatpush2.bf16.msra.mxu0 %v435
    %473 = vmatprep.subr.bf16.mxu0 0
    %474 = vmatpush2.bf16.msra.mxu0 %v434
    %475 = vmatprep.subr.bf16.mxu0 0
    %476 = vmatpush2.bf16.msra.mxu0 %v433
    %477 = vmatprep.subr.bf16.mxu0 0
    %478 = vmatpush2.bf16.msra.mxu0 %v432
    %479 = vmatprep.subr.bf16.mxu0 0
    %480 = vmatpush2.bf16.msra.mxu0 %v431
    %481 = vmatprep.subr.bf16.mxu0 0
    %482 = vmatpush2.bf16.msra.mxu0 %v430
    %483 = vmatprep.subr.bf16.mxu0 0
    %484 = vmatpush2.bf16.msra.mxu0 %v429
    %485 = vmatprep.mubr.bf16.mxu0 %v294
    %486 = vmatmul.mubr.bf16.gmra.mxu0 %v293
    %v487 = vpop.f32.mrf.mxu0
    %v488 = vadd.f32 0.0, %v487
    %v489 = vpop.f32.mrf.mxu0
    %v490 = vpop.f32.mrf.mxu0
    %v491 = vadd.f32 0.0, %v490
    %v492 = vpop.f32.mrf.mxu0
    %493 = vmatprep.mubr.bf16.mxu0 %v296
    %494 = vmatmul.mubr.bf16.gmra.mxu0 %v295
    %v495 = vpop.f32.mrf.mxu0
    %v496 = vadd.f32 0.0, %v495
    %v497 = vpop.f32.mrf.mxu0
    %v498 = vpop.f32.mrf.mxu0
    %v499 = vadd.f32 0.0, %v498
    %v500 = vpop.f32.mrf.mxu0
    %501 = vmatprep.mubr.bf16.mxu0 %v298
    %502 = vmatmul.mubr.bf16.gmra.mxu0 %v297
    %v503 = vpop.f32.mrf.mxu0
    %v504 = vadd.f32 0.0, %v503
    %v505 = vpop.f32.mrf.mxu0
    %v506 = vpop.f32.mrf.mxu0
    %v507 = vadd.f32 0.0, %v506
    %v508 = vpop.f32.mrf.mxu0
    %509 = vmatprep.mubr.bf16.mxu0 %v300
    %510 = vmatmul.mubr.bf16.gmra.mxu0 %v299
    %v511 = vpop.f32.mrf.mxu0
    %v512 = vadd.f32 0.0, %v511
    %v513 = vpop.f32.mrf.mxu0
    %v514 = vpop.f32.mrf.mxu0
    %v515 = vadd.f32 0.0, %v514
    %v516 = vpop.f32.mrf.mxu0
    %517 = vmatprep.mubr.bf16.mxu0 %v302
    %518 = vmatmul.mubr.bf16.gmra.mxu0 %v301
    %v519 = vpop.f32.mrf.mxu0
    %v520 = vadd.f32 0.0, %v519
    %v521 = vpop.f32.mrf.mxu0
    %v522 = vpop.f32.mrf.mxu0
    %v523 = vadd.f32 0.0, %v522
    %v524 = vpop.f32.mrf.mxu0
    %525 = vmatprep.mubr.bf16.mxu0 %v304
    %526 = vmatmul.mubr.bf16.gmra.mxu0 %v303
    %v527 = vpop.f32.mrf.mxu0
    %v528 = vadd.f32 0.0, %v527
    %v529 = vpop.f32.mrf.mxu0
    %v530 = vpop.f32.mrf.mxu0
    %v531 = vadd.f32 0.0, %v530
    %v532 = vpop.f32.mrf.mxu0
    %533 = vmatprep.mubr.bf16.mxu0 %v306
    %534 = vmatmul.mubr.bf16.gmra.mxu0 %v305
    %v535 = vpop.f32.mrf.mxu0
    %v536 = vadd.f32 0.0, %v535
    %v537 = vpop.f32.mrf.mxu0
    %v538 = vpop.f32.mrf.mxu0
    %v539 = vadd.f32 0.0, %v538
    %v540 = vpop.f32.mrf.mxu0
    %541 = vmatprep.mubr.bf16.mxu0 %v308
    %542 = vmatmul.mubr.bf16.gmra.mxu0 %v307
    %v543 = vpop.f32.mrf.mxu0
    %v544 = vadd.f32 0.0, %v543
    %v545 = vpop.f32.mrf.mxu0
    %v546 = vpop.f32.mrf.mxu0
    %v547 = vadd.f32 0.0, %v546
    %v548 = vpop.f32.mrf.mxu0
    %549 = vmatprep.mubr.bf16.mxu0 %v310
    %550 = vmatmul.mubr.bf16.gmra.mxu0 %v309
    %v551 = vpop.f32.mrf.mxu0
    %v552 = vadd.f32 0.0, %v551
    %v553 = vpop.f32.mrf.mxu0
    %v554 = vpop.f32.mrf.mxu0
    %v555 = vadd.f32 0.0, %v554
    %v556 = vpop.f32.mrf.mxu0
    %557 = vmatprep.mubr.bf16.mxu0 %v312
    %558 = vmatmul.mubr.bf16.gmra.mxu0 %v311
    %v559 = vpop.f32.mrf.mxu0
    %v560 = vadd.f32 0.0, %v559
    %v561 = vpop.f32.mrf.mxu0
    %v562 = vpop.f32.mrf.mxu0
    %v563 = vadd.f32 0.0, %v562
    %v564 = vpop.f32.mrf.mxu0
    %565 = vmatprep.mubr.bf16.mxu0 %v314
    %566 = vmatmul.mubr.bf16.gmra.mxu0 %v313
    %v567 = vpop.f32.mrf.mxu0
    %v568 = vadd.f32 0.0, %v567
    %v569 = vpop.f32.mrf.mxu0
    %v570 = vpop.f32.mrf.mxu0
    %v571 = vadd.f32 0.0, %v570
    %v572 = vpop.f32.mrf.mxu0
    %573 = vmatprep.mubr.bf16.mxu0 %v316
    %574 = vmatmul.mubr.bf16.gmra.mxu0 %v315
    %v575 = vpop.f32.mrf.mxu0
    %v576 = vadd.f32 0.0, %v575
    %v577 = vpop.f32.mrf.mxu0
    %v578 = vpop.f32.mrf.mxu0
    %v579 = vadd.f32 0.0, %v578
    %v580 = vpop.f32.mrf.mxu0
    %581 = vmatprep.mubr.bf16.mxu0 %v318
    %582 = vmatmul.mubr.bf16.gmra.mxu0 %v317
    %v583 = vpop.f32.mrf.mxu0
    %v584 = vadd.f32 0.0, %v583
    %v585 = vpop.f32.mrf.mxu0
    %v586 = vpop.f32.mrf.mxu0
    %v587 = vadd.f32 0.0, %v586
    %v588 = vpop.f32.mrf.mxu0
    %589 = vmatprep.mubr.bf16.mxu0 %v320
    %590 = vmatmul.mubr.bf16.gmra.mxu0 %v319
    %v591 = vpop.f32.mrf.mxu0
    %v592 = vadd.f32 0.0, %v591
    %v593 = vpop.f32.mrf.mxu0
    %v594 = vpop.f32.mrf.mxu0
    %v595 = vadd.f32 0.0, %v594
    %v596 = vpop.f32.mrf.mxu0
    %597 = vmatprep.mubr.bf16.mxu0 %v322
    %598 = vmatmul.mubr.bf16.gmra.mxu0 %v321
    %v599 = vpop.f32.mrf.mxu0
    %v600 = vadd.f32 0.0, %v599
    %v601 = vpop.f32.mrf.mxu0
    %v602 = vpop.f32.mrf.mxu0
    %v603 = vadd.f32 0.0, %v602
    %v604 = vpop.f32.mrf.mxu0
    %605 = vmatprep.mubr.bf16.mxu0 %v324
    %606 = vmatmul.mubr.bf16.gmra.mxu0 %v323
    %v607 = vpop.f32.mrf.mxu0
    %v608 = vadd.f32 0.0, %v607
    %v609 = vpop.f32.mrf.mxu0
    %v610 = vpop.f32.mrf.mxu0
    %v611 = vadd.f32 0.0, %v610
    %v612 = vpop.f32.mrf.mxu0
    %613 = vdwg.mxu0
    %v614 = vadd.f32 %v133, %v488
    %v615 = vadd.f32 %v134, %v491
    %v616 = vadd.f32 %v135, %v496
    %v617 = vadd.f32 %v136, %v499
    %v618 = vadd.f32 %v137, %v504
    %v619 = vadd.f32 %v138, %v507
    %v620 = vadd.f32 %v139, %v512
    %v621 = vadd.f32 %v140, %v515
    %v622 = vadd.f32 %v141, %v520
    %v623 = vadd.f32 %v142, %v523
    %v624 = vadd.f32 %v143, %v528
    %v625 = vadd.f32 %v144, %v531
    %v626 = vadd.f32 %v145, %v536
    %v627 = vadd.f32 %v146, %v539
    %v628 = vadd.f32 %v147, %v544
    %v629 = vadd.f32 %v148, %v547
    %v630 = vadd.f32 %v149, %v552
    %v631 = vadd.f32 %v150, %v555
    %v632 = vadd.f32 %v151, %v560
    %v633 = vadd.f32 %v152, %v563
    %v634 = vadd.f32 %v153, %v568
    %v635 = vadd.f32 %v154, %v571
    %v636 = vadd.f32 %v155, %v576
    %v637 = vadd.f32 %v156, %v579
    %v638 = vadd.f32 %v157, %v584
    %v639 = vadd.f32 %v158, %v587
    %v640 = vadd.f32 %v159, %v592
    %v641 = vadd.f32 %v160, %v595
    %v642 = vadd.f32 %v161, %v600
    %v643 = vadd.f32 %v162, %v603
    %v644 = vadd.f32 %v163, %v608
    %v645 = vadd.f32 %v164, %v611
    %646 = vst [vmem:[#allocation2] sm:$0xff] %v614
    %647 = vst [vmem:[#allocation2 + $0x8] sm:$0xff] %v615
    %648 = vst [vmem:[#allocation2 + $0x10] sm:$0xff] %v616
    %649 = vst [vmem:[#allocation2 + $0x18] sm:$0xff] %v617
    %650 = vst [vmem:[#allocation2 + $0x20] sm:$0xff] %v618
    %651 = vst [vmem:[#allocation2 + $0x28] sm:$0xff] %v619
    %652 = vst [vmem:[#allocation2 + $0x30] sm:$0xff] %v620
    %653 = vst [vmem:[#allocation2 + $0x38] sm:$0xff] %v621
    %654 = vst [vmem:[#allocation2 + $0x40] sm:$0xff] %v622
    %655 = vst [vmem:[#allocation2 + $0x48] sm:$0xff] %v623
    %656 = vst [vmem:[#allocation2 + $0x50] sm:$0xff] %v624
    %657 = vst [vmem:[#allocation2 + $0x58] sm:$0xff] %v625
    %658 = vst [vmem:[#allocation2 + $0x60] sm:$0xff] %v626
    %659 = vst [vmem:[#allocation2 + $0x68] sm:$0xff] %v627
    %660 = vst [vmem:[#allocation2 + $0x70] sm:$0xff] %v628
    %661 = vst [vmem:[#allocation2 + $0x78] sm:$0xff] %v629
    %662 = vst [vmem:[#allocation2 + $0x80] sm:$0xff] %v630
    %663 = vst [vmem:[#allocation2 + $0x88] sm:$0xff] %v631
    %664 = vst [vmem:[#allocation2 + $0x90] sm:$0xff] %v632
    %665 = vst [vmem:[#allocation2 + $0x98] sm:$0xff] %v633
    %666 = vst [vmem:[#allocation2 + $0xa0] sm:$0xff] %v634
    %667 = vst [vmem:[#allocation2 + $0xa8] sm:$0xff] %v635
    %668 = vst [vmem:[#allocation2 + $0xb0] sm:$0xff] %v636
    %669 = vst [vmem:[#allocation2 + $0xb8] sm:$0xff] %v637
    %670 = vst [vmem:[#allocation2 + $0xc0] sm:$0xff] %v638
    %671 = vst [vmem:[#allocation2 + $0xc8] sm:$0xff] %v639
    %672 = vst [vmem:[#allocation2 + $0xd0] sm:$0xff] %v640
    %673 = vst [vmem:[#allocation2 + $0xd8] sm:$0xff] %v641
    %674 = vst [vmem:[#allocation2 + $0xe0] sm:$0xff] %v642
    %675 = vst [vmem:[#allocation2 + $0xe8] sm:$0xff] %v643
    %676 = vst [vmem:[#allocation2 + $0xf0] sm:$0xff] %v644
    %677 = vst [vmem:[#allocation2 + $0xf8] sm:$0xff] %v645
    // Predicated region
    $region34: #{tpu_custom_call.1} parent=1 // pred_check
      %p678 = pneg %p60
    $region35: #{tpu_custom_call.1} parent=1 // pred_check_branch
      %680 = sbr.rel (%p678) target = $region37
    $region36: #{tpu_custom_call.1} parent=1 // pred_region
      %v681 = vld [vmem:[#allocation2] sm:$0xff]
      %v682 = vld [vmem:[#allocation2 + $0x8] sm:$0xff]
      %v683 = vld [vmem:[#allocation2 + $0x10] sm:$0xff]
      %v684 = vld [vmem:[#allocation2 + $0x18] sm:$0xff]
      %v685 = vld [vmem:[#allocation2 + $0x20] sm:$0xff]
      %v686 = vld [vmem:[#allocation2 + $0x28] sm:$0xff]
      %v687 = vld [vmem:[#allocation2 + $0x30] sm:$0xff]
      %v688 = vld [vmem:[#allocation2 + $0x38] sm:$0xff]
      %v689 = vld [vmem:[#allocation2 + $0x40] sm:$0xff]
      %v690 = vld [vmem:[#allocation2 + $0x48] sm:$0xff]
      %v691 = vld [vmem:[#allocation2 + $0x50] sm:$0xff]
      %v692 = vld [vmem:[#allocation2 + $0x58] sm:$0xff]
      %v693 = vld [vmem:[#allocation2 + $0x60] sm:$0xff]
      %v694 = vld [vmem:[#allocation2 + $0x68] sm:$0xff]
      %v695 = vld [vmem:[#allocation2 + $0x70] sm:$0xff]
      %v696 = vld [vmem:[#allocation2 + $0x78] sm:$0xff]
      %v697 = vld [vmem:[#allocation2 + $0x80] sm:$0xff]
      %v698 = vld [vmem:[#allocation2 + $0x88] sm:$0xff]
      %v699 = vld [vmem:[#allocation2 + $0x90] sm:$0xff]
      %v700 = vld [vmem:[#allocation2 + $0x98] sm:$0xff]
      %v701 = vld [vmem:[#allocation2 + $0xa0] sm:$0xff]
      %v702 = vld [vmem:[#allocation2 + $0xa8] sm:$0xff]
      %v703 = vld [vmem:[#allocation2 + $0xb0] sm:$0xff]
      %v704 = vld [vmem:[#allocation2 + $0xb8] sm:$0xff]
      %v705 = vld [vmem:[#allocation2 + $0xc0] sm:$0xff]
      %v706 = vld [vmem:[#allocation2 + $0xc8] sm:$0xff]
      %v707 = vld [vmem:[#allocation2 + $0xd0] sm:$0xff]
      %v708 = vld [vmem:[#allocation2 + $0xd8] sm:$0xff]
      %v709 = vld [vmem:[#allocation2 + $0xe0] sm:$0xff]
      %v710 = vld [vmem:[#allocation2 + $0xe8] sm:$0xff]
      %v711 = vld [vmem:[#allocation2 + $0xf0] sm:$0xff]
      %v712 = vld [vmem:[#allocation2 + $0xf8] sm:$0xff]
      %v713 = vld [vmem:[#allocation8] sm:$0xff]
      %v714 = vld [vmem:[#allocation8 + $0x8] sm:$0xff]
      %v715 = vld [vmem:[#allocation8 + $0x10] sm:$0xff]
      %v716 = vld [vmem:[#allocation8 + $0x18] sm:$0xff]
      %v717 = vld [vmem:[#allocation8 + $0x20] sm:$0xff]
      %v718 = vld [vmem:[#allocation8 + $0x28] sm:$0xff]
      %v719 = vld [vmem:[#allocation8 + $0x30] sm:$0xff]
      %v720 = vld [vmem:[#allocation8 + $0x38] sm:$0xff]
      %v721 = vld [vmem:[#allocation8 + $0x40] sm:$0xff]
      %v722 = vld [vmem:[#allocation8 + $0x48] sm:$0xff]
      %v723 = vld [vmem:[#allocation8 + $0x50] sm:$0xff]
      %v724 = vld [vmem:[#allocation8 + $0x58] sm:$0xff]
      %v725 = vld [vmem:[#allocation8 + $0x60] sm:$0xff]
      %v726 = vld [vmem:[#allocation8 + $0x68] sm:$0xff]
      %v727 = vld [vmem:[#allocation8 + $0x70] sm:$0xff]
      %v728 = vld [vmem:[#allocation8 + $0x78] sm:$0xff]
      %v729 = vld [vmem:[%s3] sm:$0x1]
      %v731 = vlaneseq
      %v732 = vshrl.u32 %v731, 7
      %v733 = vsub.s32 0, %v732
      %v734 = vrot.slane %v729, %v733
      %736 = vmatprep.subr.mxu0 0.0
      %737 = vmatpush1.msra.mxu0 %v728
      %738 = vmatprep.subr.mxu0 0.0
      %739 = vmatpush1.msra.mxu0 %v727
      %740 = vmatprep.subr.mxu0 0.0
      %741 = vmatpush1.msra.mxu0 %v726
      %742 = vmatprep.subr.mxu0 0.0
      %743 = vmatpush1.msra.mxu0 %v725
      %744 = vmatprep.subr.mxu0 0.0
      %745 = vmatpush1.msra.mxu0 %v724
      %746 = vmatprep.subr.mxu0 0.0
      %747 = vmatpush1.msra.mxu0 %v723
      %748 = vmatprep.subr.mxu0 0.0
      %749 = vmatpush1.msra.mxu0 %v722
      %750 = vmatprep.subr.mxu0 0.0
      %751 = vmatpush1.msra.mxu0 %v721
      %752 = vmatprep.subr.mxu0 0.0
      %753 = vmatpush1.msra.mxu0 %v720
      %754 = vmatprep.subr.mxu0 0.0
      %755 = vmatpush1.msra.mxu0 %v719
      %756 = vmatprep.subr.mxu0 0.0
      %757 = vmatpush1.msra.mxu0 %v718
      %758 = vmatprep.subr.mxu0 0.0
      %759 = vmatpush1.msra.mxu0 %v717
      %760 = vmatprep.subr.mxu0 0.0
      %761 = vmatpush1.msra.mxu0 %v716
      %762 = vmatprep.subr.mxu0 0.0
      %763 = vmatpush1.msra.mxu0 %v715
      %764 = vmatprep.subr.mxu0 0.0
      %765 = vmatpush1.msra.mxu0 %v714
      %766 = vmatprep.subr.mxu0 0.0
      %767 = vmatpush1.msra.mxu0 %v713
      %768 = vmatprep.subr.mxu0 0.0
      %769 = vmatpush2.msra.mxu0 0.0
      %770 = vmatprep.subr.mxu0 0.0
      %771 = vmatpush2.msra.mxu0 0.0
      %772 = vmatprep.subr.mxu0 0.0
      %773 = vmatpush2.msra.mxu0 0.0
      %774 = vmatprep.subr.mxu0 0.0
      %775 = vmatpush2.msra.mxu0 0.0
      %776 = vmatprep.subr.mxu0 0.0
      %777 = vmatpush2.msra.mxu0 0.0
      %778 = vmatprep.subr.mxu0 0.0
      %779 = vmatpush2.msra.mxu0 0.0
      %780 = vmatprep.subr.mxu0 0.0
      %781 = vmatpush2.msra.mxu0 0.0
      %782 = vmatprep.subr.mxu0 0.0
      %783 = vmatpush2.msra.mxu0 0.0
      %784 = vmatprep.subr.mxu0 0.0
      %785 = vmatpush2.msra.mxu0 0.0
      %786 = vmatprep.subr.mxu0 0.0
      %787 = vmatpush2.msra.mxu0 0.0
      %788 = vmatprep.subr.mxu0 0.0
      %789 = vmatpush2.msra.mxu0 0.0
      %790 = vmatprep.subr.mxu0 0.0
      %791 = vmatpush2.msra.mxu0 0.0
      %792 = vmatprep.subr.mxu0 0.0
      %793 = vmatpush2.msra.mxu0 0.0
      %794 = vmatprep.subr.mxu0 0.0
      %795 = vmatpush2.msra.mxu0 0.0
      %796 = vmatprep.subr.mxu0 0.0
      %797 = vmatpush2.msra.mxu0 0.0
      %798 = vmatprep.subr.mxu0 0.0
      %799 = vmatpush2.msra.mxu0 0.0
      %800 = vmatprep.mubr.f32.mxu0 0.0
      %801 = vmatmul.mubr.f32.gmra.mxu0 %v681
      %v802 = vpop.f32.mrf.mxu0
      %v803 = vadd.f32 %v734, %v802
      %v804 = vpop.f32.mrf.mxu0
      %805 = vmatprep.mubr.f32.mxu0 0.0
      %806 = vmatmul.mubr.f32.gmra.mxu0 %v682
      %v807 = vpop.f32.mrf.mxu0
      %v808 = vadd.f32 %v734, %v807
      %v809 = vpop.f32.mrf.mxu0
      %810 = vmatprep.mubr.f32.mxu0 0.0
      %811 = vmatmul.mubr.f32.gmra.mxu0 %v683
      %v812 = vpop.f32.mrf.mxu0
      %v813 = vadd.f32 %v734, %v812
      %v814 = vpop.f32.mrf.mxu0
      %815 = vmatprep.mubr.f32.mxu0 0.0
      %816 = vmatmul.mubr.f32.gmra.mxu0 %v684
      %v817 = vpop.f32.mrf.mxu0
      %v818 = vadd.f32 %v734, %v817
      %v819 = vpop.f32.mrf.mxu0
      %820 = vmatprep.mubr.f32.mxu0 0.0
      %821 = vmatmul.mubr.f32.gmra.mxu0 %v685
      %v822 = vpop.f32.mrf.mxu0
      %v823 = vadd.f32 %v734, %v822
      %v824 = vpop.f32.mrf.mxu0
      %825 = vmatprep.mubr.f32.mxu0 0.0
      %826 = vmatmul.mubr.f32.gmra.mxu0 %v686
      %v827 = vpop.f32.mrf.mxu0
      %v828 = vadd.f32 %v734, %v827
      %v829 = vpop.f32.mrf.mxu0
      %830 = vmatprep.mubr.f32.mxu0 0.0
      %831 = vmatmul.mubr.f32.gmra.mxu0 %v687
      %v832 = vpop.f32.mrf.mxu0
      %v833 = vadd.f32 %v734, %v832
      %v834 = vpop.f32.mrf.mxu0
      %835 = vmatprep.mubr.f32.mxu0 0.0
      %836 = vmatmul.mubr.f32.gmra.mxu0 %v688
      %v837 = vpop.f32.mrf.mxu0
      %v838 = vadd.f32 %v734, %v837
      %v839 = vpop.f32.mrf.mxu0
      %840 = vmatprep.mubr.f32.mxu0 0.0
      %841 = vmatmul.mubr.f32.gmra.mxu0 %v689
      %v842 = vpop.f32.mrf.mxu0
      %v843 = vadd.f32 %v734, %v842
      %v844 = vpop.f32.mrf.mxu0
      %845 = vmatprep.mubr.f32.mxu0 0.0
      %846 = vmatmul.mubr.f32.gmra.mxu0 %v690
      %v847 = vpop.f32.mrf.mxu0
      %v848 = vadd.f32 %v734, %v847
      %v849 = vpop.f32.mrf.mxu0
      %850 = vmatprep.mubr.f32.mxu0 0.0
      %851 = vmatmul.mubr.f32.gmra.mxu0 %v691
      %v852 = vpop.f32.mrf.mxu0
      %v853 = vadd.f32 %v734, %v852
      %v854 = vpop.f32.mrf.mxu0
      %855 = vmatprep.mubr.f32.mxu0 0.0
      %856 = vmatmul.mubr.f32.gmra.mxu0 %v692
      %v857 = vpop.f32.mrf.mxu0
      %v858 = vadd.f32 %v734, %v857
      %v859 = vpop.f32.mrf.mxu0
      %860 = vmatprep.mubr.f32.mxu0 0.0
      %861 = vmatmul.mubr.f32.gmra.mxu0 %v693
      %v862 = vpop.f32.mrf.mxu0
      %v863 = vadd.f32 %v734, %v862
      %v864 = vpop.f32.mrf.mxu0
      %865 = vmatprep.mubr.f32.mxu0 0.0
      %866 = vmatmul.mubr.f32.gmra.mxu0 %v694
      %v867 = vpop.f32.mrf.mxu0
      %v868 = vadd.f32 %v734, %v867
      %v869 = vpop.f32.mrf.mxu0
      %870 = vmatprep.mubr.f32.mxu0 0.0
      %871 = vmatmul.mubr.f32.gmra.mxu0 %v695
      %v872 = vpop.f32.mrf.mxu0
      %v873 = vadd.f32 %v734, %v872
      %v874 = vpop.f32.mrf.mxu0
      %875 = vmatprep.mubr.f32.mxu0 0.0
      %876 = vmatmul.mubr.f32.gmra.mxu0 %v696
      %v877 = vpop.f32.mrf.mxu0
      %v878 = vadd.f32 %v734, %v877
      %v879 = vpop.f32.mrf.mxu0
      %880 = vmatprep.mubr.f32.mxu0 0.0
      %881 = vmatmul.mubr.f32.gmra.mxu0 %v697
      %v882 = vpop.f32.mrf.mxu0
      %v883 = vadd.f32 %v734, %v882
      %v884 = vpop.f32.mrf.mxu0
      %885 = vmatprep.mubr.f32.mxu0 0.0
      %886 = vmatmul.mubr.f32.gmra.mxu0 %v698
      %v887 = vpop.f32.mrf.mxu0
      %v888 = vadd.f32 %v734, %v887
      %v889 = vpop.f32.mrf.mxu0
      %890 = vmatprep.mubr.f32.mxu0 0.0
      %891 = vmatmul.mubr.f32.gmra.mxu0 %v699
      %v892 = vpop.f32.mrf.mxu0
      %v893 = vadd.f32 %v734, %v892
      %v894 = vpop.f32.mrf.mxu0
      %895 = vmatprep.mubr.f32.mxu0 0.0
      %896 = vmatmul.mubr.f32.gmra.mxu0 %v700
      %v897 = vpop.f32.mrf.mxu0
      %v898 = vadd.f32 %v734, %v897
      %v899 = vpop.f32.mrf.mxu0
      %900 = vmatprep.mubr.f32.mxu0 0.0
      %901 = vmatmul.mubr.f32.gmra.mxu0 %v701
      %v902 = vpop.f32.mrf.mxu0
      %v903 = vadd.f32 %v734, %v902
      %v904 = vpop.f32.mrf.mxu0
      %905 = vmatprep.mubr.f32.mxu0 0.0
      %906 = vmatmul.mubr.f32.gmra.mxu0 %v702
      %v907 = vpop.f32.mrf.mxu0
      %v908 = vadd.f32 %v734, %v907
      %v909 = vpop.f32.mrf.mxu0
      %910 = vmatprep.mubr.f32.mxu0 0.0
      %911 = vmatmul.mubr.f32.gmra.mxu0 %v703
      %v912 = vpop.f32.mrf.mxu0
      %v913 = vadd.f32 %v734, %v912
      %v914 = vpop.f32.mrf.mxu0
      %915 = vmatprep.mubr.f32.mxu0 0.0
      %916 = vmatmul.mubr.f32.gmra.mxu0 %v704
      %v917 = vpop.f32.mrf.mxu0
      %v918 = vadd.f32 %v734, %v917
      %v919 = vpop.f32.mrf.mxu0
      %920 = vmatprep.mubr.f32.mxu0 0.0
      %921 = vmatmul.mubr.f32.gmra.mxu0 %v705
      %v922 = vpop.f32.mrf.mxu0
      %v923 = vadd.f32 %v734, %v922
      %v924 = vpop.f32.mrf.mxu0
      %925 = vmatprep.mubr.f32.mxu0 0.0
      %926 = vmatmul.mubr.f32.gmra.mxu0 %v706
      %v927 = vpop.f32.mrf.mxu0
      %v928 = vadd.f32 %v734, %v927
      %v929 = vpop.f32.mrf.mxu0
      %930 = vmatprep.mubr.f32.mxu0 0.0
      %931 = vmatmul.mubr.f32.gmra.mxu0 %v707
      %v932 = vpop.f32.mrf.mxu0
      %v933 = vadd.f32 %v734, %v932
      %v934 = vpop.f32.mrf.mxu0
      %935 = vmatprep.mubr.f32.mxu0 0.0
      %936 = vmatmul.mubr.f32.gmra.mxu0 %v708
      %v937 = vpop.f32.mrf.mxu0
      %v938 = vadd.f32 %v734, %v937
      %v939 = vpop.f32.mrf.mxu0
      %940 = vmatprep.mubr.f32.mxu0 0.0
      %941 = vmatmul.mubr.f32.gmra.mxu0 %v709
      %v942 = vpop.f32.mrf.mxu0
      %v943 = vadd.f32 %v734, %v942
      %v944 = vpop.f32.mrf.mxu0
      %945 = vmatprep.mubr.f32.mxu0 0.0
      %946 = vmatmul.mubr.f32.gmra.mxu0 %v710
      %v947 = vpop.f32.mrf.mxu0
      %v948 = vadd.f32 %v734, %v947
      %v949 = vpop.f32.mrf.mxu0
      %950 = vmatprep.mubr.f32.mxu0 0.0
      %951 = vmatmul.mubr.f32.gmra.mxu0 %v711
      %v952 = vpop.f32.mrf.mxu0
      %v953 = vadd.f32 %v734, %v952
      %v954 = vpop.f32.mrf.mxu0
      %955 = vmatprep.mubr.f32.mxu0 0.0
      %956 = vmatmul.mubr.f32.gmra.mxu0 %v712
      %v957 = vpop.f32.mrf.mxu0
      %v958 = vadd.f32 %v734, %v957
      %v959 = vpop.f32.mrf.mxu0
      %960 = vdwg.mxu0
      %v961 = vmax.f32 %v803, 0.0
      %v962 = vmax.f32 %v808, 0.0
      %v963 = vmax.f32 %v813, 0.0
      %v964 = vmax.f32 %v818, 0.0
      %v965 = vmax.f32 %v823, 0.0
      %v966 = vmax.f32 %v828, 0.0
      %v967 = vmax.f32 %v833, 0.0
      %v968 = vmax.f32 %v838, 0.0
      %v969 = vmax.f32 %v843, 0.0
      %v970 = vmax.f32 %v848, 0.0
      %v971 = vmax.f32 %v853, 0.0
      %v972 = vmax.f32 %v858, 0.0
      %v973 = vmax.f32 %v863, 0.0
      %v974 = vmax.f32 %v868, 0.0
      %v975 = vmax.f32 %v873, 0.0
      %v976 = vmax.f32 %v878, 0.0
      %v977 = vmax.f32 %v883, 0.0
      %v978 = vmax.f32 %v888, 0.0
      %v979 = vmax.f32 %v893, 0.0
      %v980 = vmax.f32 %v898, 0.0
      %v981 = vmax.f32 %v903, 0.0
      %v982 = vmax.f32 %v908, 0.0
      %v983 = vmax.f32 %v913, 0.0
      %v984 = vmax.f32 %v918, 0.0
      %v985 = vmax.f32 %v923, 0.0
      %v986 = vmax.f32 %v928, 0.0
      %v987 = vmax.f32 %v933, 0.0
      %v988 = vmax.f32 %v938, 0.0
      %v989 = vmax.f32 %v943, 0.0
      %v990 = vmax.f32 %v948, 0.0
      %v991 = vmax.f32 %v953, 0.0
      %v992 = vmax.f32 %v958, 0.0
      %v993 = vpack.c.bf16 %v962, %v961
      %v994 = vpack.c.bf16 %v964, %v963
      %v995 = vpack.c.bf16 %v966, %v965
      %v996 = vpack.c.bf16 %v968, %v967
      %v997 = vpack.c.bf16 %v970, %v969
      %v998 = vpack.c.bf16 %v972, %v971
      %v999 = vpack.c.bf16 %v974, %v973
      %v1000 = vpack.c.bf16 %v976, %v975
      %v1001 = vpack.c.bf16 %v978, %v977
      %v1002 = vpack.c.bf16 %v980, %v979
      %v1003 = vpack.c.bf16 %v982, %v981
      %v1004 = vpack.c.bf16 %v984, %v983
      %v1005 = vpack.c.bf16 %v986, %v985
      %v1006 = vpack.c.bf16 %v988, %v987
      %v1007 = vpack.c.bf16 %v990, %v989
      %v1008 = vpack.c.bf16 %v992, %v991
      %v1025 = vunpack.c.l.b16 %v993
      %v1026 = vunpack.c.h.b16 %v993
      %v1027 = vunpack.c.l.b16 %v994
      %v1028 = vunpack.c.h.b16 %v994
      %v1029 = vunpack.c.l.b16 %v995
      %v1030 = vunpack.c.h.b16 %v995
      %v1031 = vunpack.c.l.b16 %v996
      %v1032 = vunpack.c.h.b16 %v996
      %v1033 = vunpack.c.l.b16 %v997
      %v1034 = vunpack.c.h.b16 %v997
      %v1035 = vunpack.c.l.b16 %v998
      %v1036 = vunpack.c.h.b16 %v998
      %v1037 = vunpack.c.l.b16 %v999
      %v1038 = vunpack.c.h.b16 %v999
      %v1039 = vunpack.c.l.b16 %v1000
      %v1040 = vunpack.c.h.b16 %v1000
      %v1041 = vunpack.c.l.b16 %v1001
      %v1042 = vunpack.c.h.b16 %v1001
      %v1043 = vunpack.c.l.b16 %v1002
      %v1044 = vunpack.c.h.b16 %v1002
      %v1045 = vunpack.c.l.b16 %v1003
      %v1046 = vunpack.c.h.b16 %v1003
      %v1047 = vunpack.c.l.b16 %v1004
      %v1048 = vunpack.c.h.b16 %v1004
      %v1049 = vunpack.c.l.b16 %v1005
      %v1050 = vunpack.c.h.b16 %v1005
      %v1051 = vunpack.c.l.b16 %v1006
      %v1052 = vunpack.c.h.b16 %v1006
      %v1053 = vunpack.c.l.b16 %v1007
      %v1054 = vunpack.c.h.b16 %v1007
      %v1055 = vunpack.c.l.b16 %v1008
      %v1056 = vunpack.c.h.b16 %v1008
      %v1057 = vpack.c.b16 %v1025, %v1025
      %v1058 = vpack.c.b16 %v1026, %v1026
      %v1059 = vpack.c.b16 %v1027, %v1027
      %v1060 = vpack.c.b16 %v1028, %v1028
      %v1061 = vpack.c.b16 %v1029, %v1029
      %v1062 = vpack.c.b16 %v1030, %v1030
      %v1063 = vpack.c.b16 %v1031, %v1031
      %v1064 = vpack.c.b16 %v1032, %v1032
      %v1065 = vpack.c.b16 %v1033, %v1033
      %v1066 = vpack.c.b16 %v1034, %v1034
      %v1067 = vpack.c.b16 %v1035, %v1035
      %v1068 = vpack.c.b16 %v1036, %v1036
      %v1069 = vpack.c.b16 %v1037, %v1037
      %v1070 = vpack.c.b16 %v1038, %v1038
      %v1071 = vpack.c.b16 %v1039, %v1039
      %v1072 = vpack.c.b16 %v1040, %v1040
      %v1073 = vpack.c.b16 %v1041, %v1041
      %v1074 = vpack.c.b16 %v1042, %v1042
      %v1075 = vpack.c.b16 %v1043, %v1043
      %v1076 = vpack.c.b16 %v1044, %v1044
      %v1077 = vpack.c.b16 %v1045, %v1045
      %v1078 = vpack.c.b16 %v1046, %v1046
      %v1079 = vpack.c.b16 %v1047, %v1047
      %v1080 = vpack.c.b16 %v1048, %v1048
      %v1081 = vpack.c.b16 %v1049, %v1049
      %v1082 = vpack.c.b16 %v1050, %v1050
      %v1083 = vpack.c.b16 %v1051, %v1051
      %v1084 = vpack.c.b16 %v1052, %v1052
      %v1085 = vpack.c.b16 %v1053, %v1053
      %v1086 = vpack.c.b16 %v1054, %v1054
      %v1087 = vpack.c.b16 %v1055, %v1055
      %v1088 = vpack.c.b16 %v1056, %v1056
      %1121 = vst [vmem:[#allocation9] sm:$0xf] %v1057
      %1122 = vst [vmem:[#allocation9 + $0x4] sm:$0xf] %v1058
      %1123 = vst [vmem:[#allocation9 + $0x8] sm:$0xf] %v1059
      %1124 = vst [vmem:[#allocation9 + $0xc] sm:$0xf] %v1060
      %1125 = vst [vmem:[#allocation9 + $0x10] sm:$0xf] %v1061
      %1126 = vst [vmem:[#allocation9 + $0x14] sm:$0xf] %v1062
      %1127 = vst [vmem:[#allocation9 + $0x18] sm:$0xf] %v1063
      %1128 = vst [vmem:[#allocation9 + $0x1c] sm:$0xf] %v1064
      %1129 = vst [vmem:[#allocation9 + $0x20] sm:$0xf] %v1065
      %1130 = vst [vmem:[#allocation9 + $0x24] sm:$0xf] %v1066
      %1131 = vst [vmem:[#allocation9 + $0x28] sm:$0xf] %v1067
      %1132 = vst [vmem:[#allocation9 + $0x2c] sm:$0xf] %v1068
      %1133 = vst [vmem:[#allocation9 + $0x30] sm:$0xf] %v1069
      %1134 = vst [vmem:[#allocation9 + $0x34] sm:$0xf] %v1070
      %1135 = vst [vmem:[#allocation9 + $0x38] sm:$0xf] %v1071
      %1136 = vst [vmem:[#allocation9 + $0x3c] sm:$0xf] %v1072
      %1137 = vst [vmem:[#allocation9 + $0x40] sm:$0xf] %v1073
      %1138 = vst [vmem:[#allocation9 + $0x44] sm:$0xf] %v1074
      %1139 = vst [vmem:[#allocation9 + $0x48] sm:$0xf] %v1075
      %1140 = vst [vmem:[#allocation9 + $0x4c] sm:$0xf] %v1076
      %1141 = vst [vmem:[#allocation9 + $0x50] sm:$0xf] %v1077
      %1142 = vst [vmem:[#allocation9 + $0x54] sm:$0xf] %v1078
      %1143 = vst [vmem:[#allocation9 + $0x58] sm:$0xf] %v1079
      %1144 = vst [vmem:[#allocation9 + $0x5c] sm:$0xf] %v1080
      %1145 = vst [vmem:[#allocation9 + $0x60] sm:$0xf] %v1081
      %1146 = vst [vmem:[#allocation9 + $0x64] sm:$0xf] %v1082
      %1147 = vst [vmem:[#allocation9 + $0x68] sm:$0xf] %v1083
      %1148 = vst [vmem:[#allocation9 + $0x6c] sm:$0xf] %v1084
      %1149 = vst [vmem:[#allocation9 + $0x70] sm:$0xf] %v1085
      %1150 = vst [vmem:[#allocation9 + $0x74] sm:$0xf] %v1086
      %1151 = vst [vmem:[#allocation9 + $0x78] sm:$0xf] %v1087
      %1152 = vst [vmem:[#allocation9 + $0x7c] sm:$0xf] %v1088
    $region37: #{tpu_custom_call.1} parent=1 // pred_fallthru
      _
    // Predicated region
    $region38: #{tpu_custom_call.1} parent=1 // pred_check
      _
    $region39: #{tpu_custom_call.1} parent=1 // pred_check_branch
      %1154 = sbr.rel (0) target = $region41
    $region40: #{tpu_custom_call.1} parent=1 // pred_region
      %s1156 = ssub.s32 2048, 2048
      %1157 = vsyncadd [#allocation5], %s1156
      %s1158 = sshll.u32 [#allocation9], 4
      %s1159 = int_to_ptr.vmem [resolvable:$true] %s1158
      %1164 = dma.vmem_to_hbm [thread:$0]  %s1159, 2048, %s4, [#allocation5], 64, 64, 4
    $region41: #{tpu_custom_call.1} parent=1 // pred_fallthru
      _
    // Predicated region
    $region42: #{tpu_custom_call.1} parent=1 // pred_check
      _
    $region43: #{tpu_custom_call.1} parent=1 // pred_check_branch
      %1166 = sbr.rel (0) target = $region45
    $region44: #{tpu_custom_call.1} parent=1 // pred_region
      %1167 = dma.done [#allocation5], 2048
    $region45: #{tpu_custom_call.1} parent=1 // pred_fallthru
      _
    %1168 = vsyncpa [#allocation4], 1
    %1169 = vsyncpa [#allocation7], 1
    %1170 = vsyncpa [#allocation5], 1

</llo_original>
